<compile_context>
chip_gen: v5e
topology: v5e:2x2
jax: 0.10.0
libtpu: 0.0.40
codegen_flags: <defaults>
</compile_context>

<pallas_src>
import functools
import math

import jax
import jax.numpy as jnp
from jax.experimental import pallas as pl
from jax.experimental.pallas import tpu as pltpu

SAMPLING_EPSILON = 1e-6

# Tile sizes (f32).  x block = (TILE_N, 2, TILE_F), out block = (TILE_N, TILE_F).
# Worst case VMEM (size-2 second-minor dim padded to 8 sublanes, double
# buffered): 256*8*1024*4*2 + 256*1024*4*2 ~= 18 MiB < 32 MiB scoped limit,
# safe on v5e/v6e (128 MiB phys) and v7x (64 MiB phys).
_MAX_TILE_N = 256
_MAX_TILE_F = 1024

# int32 views of the usual 32-bit hashing constants.
_M1 = -1640531527    # 0x9E3779B9
_M2 = -2048144789    # 0x85EBCA6B
_M3 = -1028477387    # 0xC2B2AE35
_M4 = 668265263      # 0x27D4EB2F


def _srl(x, n):
    """Logical right shift for int32 (arithmetic shift + mask)."""
    return (x >> n) & jnp.int32((1 << (32 - n)) - 1)


def _fmix32(h):
    """murmur3 finalizer: good avalanche, pure int32 VPU ops."""
    h = h ^ _srl(h, 16)
    h = h * jnp.int32(_M2)
    h = h ^ _srl(h, 13)
    h = h * jnp.int32(_M3)
    h = h ^ _srl(h, 16)
    return h


def _erfinv_f32(x):
    """Single-precision erfinv polynomial (M. Giles, 2010). Pure VPU/EUP ops."""
    w = -jnp.log((1.0 - x) * (1.0 + x))
    w = jnp.maximum(w, 1e-6)  # guard against rounding pushing w slightly < 0

    w_small = w - 2.5
    p_small = jnp.float32(2.81022636e-08)
    for c in (3.43273939e-07, -3.5233877e-06, -4.39150654e-06, 2.1858087e-04,
              -1.25372503e-03, -4.17768164e-03, 2.46640727e-01, 1.50140941e+00):
        p_small = p_small * w_small + jnp.float32(c)

    w_big = jnp.sqrt(w) - 3.0
    p_big = jnp.float32(-2.00214257e-04)
    for c in (1.00950558e-04, 1.34934322e-03, -3.67342844e-03, 5.73950773e-03,
              -7.62246130e-03, 9.43887047e-03, 1.00167406e+00, 2.83297682e+00):
        p_big = p_big * w_big + jnp.float32(c)

    return jnp.where(w < 5.0, p_small, p_big) * x


def _local_reparam_kernel(seed_ref, x_ref, out_ref):
    # x_ref: (tile_n, 2, tile_f) block of x, out_ref: (tile_n, tile_f) f32.
    tn, _, tf = x_ref.shape
    i = pl.program_id(0)
    j = pl.program_id(1)

    mean = x_ref[:, 0, :].astype(jnp.float32)
    var = x_ref[:, 1, :].astype(jnp.float32)

    # --- counter-based N(0,1) noise: hash(global_row, global_col, seed) -------
    # Depends only on global coordinates + seed -> identical regardless of
    # tiling or grid execution order (megacore / "parallel" safe).
    rows = jax.lax.broadcasted_iota(jnp.int32, (tn, tf), 0) + i * tn
    cols = jax.lax.broadcasted_iota(jnp.int32, (tn, tf), 1) + j * tf
    seed = seed_ref[0]

    h = (rows * jnp.int32(_M1)) ^ (cols * jnp.int32(_M2)) ^ (seed * jnp.int32(_M3))
    h = _fmix32(h)
    h = _fmix32(h ^ jnp.int32(_M4))

    # top 24 bits -> uniform strictly inside (0, 1) -> inverse-CDF Gaussian.
    u = (_srl(h, 8).astype(jnp.float32) + 0.5) * jnp.float32(1.0 / (1 << 24))
    eps = jnp.float32(math.sqrt(2.0)) * _erfinv_f32(2.0 * u - 1.0)

    out_ref[...] = mean + jnp.sqrt(var + jnp.float32(SAMPLING_EPSILON)) * eps


@functools.partial(jax.jit, static_argnames=("tile_n", "tile_f"))
def _local_reparam_2d(x3, seed_arr, *, tile_n, tile_f):
    """x3: (N, 2, F) any float dtype. Returns (N, F) float32."""
    N, _, F = x3.shape
    grid = (pl.cdiv(N, tile_n), pl.cdiv(F, tile_f))

    return pl.pallas_call(
        _local_reparam_kernel,
        out_shape=jax.ShapeDtypeStruct((N, F), jnp.float32),
        grid_spec=pltpu.PrefetchScalarGridSpec(
            num_scalar_prefetch=1,
            grid=grid,
            in_specs=[
                # Single input: the whole x block, mean/var split in-kernel.
                # Second-minor block dim (2) equals the full array dim -> legal.
                pl.BlockSpec((tile_n, 2, tile_f), lambda i, j, seed_ref: (i, 0, j)),
            ],
            out_specs=pl.BlockSpec((tile_n, tile_f), lambda i, j, seed_ref: (i, j)),
        ),
        compiler_params=pltpu.CompilerParams(
            # Per-tile noise is order-independent -> both axes parallel
            # (lets v7x shard the grid across its 2 TensorCores).
            dimension_semantics=("parallel", "parallel"),
            vmem_limit_bytes=32 * 1024 * 1024,
        ),
    )(seed_arr, x3)


def local_reparametrization(x, seed=0):
    """JAX/Pallas equivalent of LocalReparametrization.forward.

    x: (n, 2, num_features) or (n, 2, C, H, W); axis 1 holds [mean, var].
    Returns float32 tensor of shape (n, num_features) or (n, C, H, W).
    """
    x = jnp.asarray(x)
    if x.ndim == 3:
        n, two, f = x.shape
        if two != 2:
            raise ValueError(f"x has invalid shape : {x.shape}")
        x3 = x
        out_shape = (n, f)
    elif x.ndim == 5:
        n, two, c, h, w = x.shape
        if two != 2:
            raise ValueError(f"x has invalid shape : {x.shape}")
        x3 = x.reshape(n, 2, c * h * w)  # row-major collapse: free, no copy
        out_shape = (n, c, h, w)
    else:
        raise ValueError(f"x has invalid shape : {x.shape}")

    N, _, F = x3.shape
    tile_n = N if N <= _MAX_TILE_N else _MAX_TILE_N
    tile_f = F if F <= _MAX_TILE_F else _MAX_TILE_F
    seed_arr = jnp.asarray([seed], dtype=jnp.int32)

    out2d = _local_reparam_2d(x3, seed_arr, tile_n=tile_n, tile_f=tile_f)
    return out2d.reshape(out_shape)


if __name__ == "__main__":
    key = jax.random.PRNGKey(0)
    k1, k2, k3, k4 = jax.random.split(key, 4)

    # 5-D (conv-style) case: (n=2, 2, C=4, H=16, W=16)
    mean5 = jax.random.normal(k1, (2, 4, 16, 16), dtype=jnp.float32)
    var5 = jnp.square(jax.random.normal(k2, (2, 4, 16, 16), dtype=jnp.float32))
    x5 = jnp.stack([mean5, var5], axis=1)  # (2, 2, 4, 16, 16)
    out5 = jax.block_until_ready(local_reparametrization(x5, seed=123))
    assert out5.shape == (2, 4, 16, 16) and out5.dtype == jnp.float32

    # 3-D (dense-style) case: (n=2, 2, num_features=256)
    mean3 = jax.random.normal(k3, (2, 256), dtype=jnp.float32)
    var3 = jnp.square(jax.random.normal(k4, (2, 256), dtype=jnp.float32))
    x3 = jnp.stack([mean3, var3], axis=1)  # (2, 2, 256)
    out3 = jax.block_until_ready(local_reparametrization(x3, seed=7))
    assert out3.shape == (2, 256) and out3.dtype == jnp.float32

    # Sanity: implied eps = (out - mean) / sqrt(var + 1e-6) should look N(0, 1).
    eps5 = (out5 - mean5) / jnp.sqrt(var5 + SAMPLING_EPSILON)
    assert bool(jnp.all(jnp.isfinite(out5))) and bool(jnp.all(jnp.isfinite(out3)))
    assert bool(jnp.all(jnp.abs(eps5) <= 8.0))
    assert abs(float(jnp.mean(eps5))) < 0.2
    assert 0.8 < float(jnp.std(eps5)) < 1.2

    # Different seeds give different samples.
    out5_b = jax.block_until_ready(local_reparametrization(x5, seed=124))
    assert bool(jnp.any(jnp.abs(out5_b - out5) > 1e-6))

    print("KERNEL_OK")
</pallas_src>

<mosaic_0001>
module attributes {stable_mosaic.version = 11 : i64} {
  func.func @_local_reparam_kernel(%arg0: i32, %arg1: i32, %arg2: memref<1xi32, #tpu.memory_space<smem>>, %arg3: memref<2x2x1024xf32, #tpu.memory_space<vmem>>, %arg4: memref<2x1024xf32, #tpu.memory_space<vmem>>) attributes {dimension_semantics = [#tpu.dimension_semantics<parallel>, #tpu.dimension_semantics<parallel>], iteration_bounds = array<i64: 1, 1>, scalar_prefetch = 1 : i64, scratch_operands = 0 : i64, tpu.core_type = #tpu.core_type<tc>, window_params = [{transform_indices = @transform_0, window_bounds = array<i64: 2, 2, 1024>}, {transform_indices = @transform_1, window_bounds = array<i64: 2, 1024>}]} {
    %c0 = arith.constant 0 : index
    %c0_0 = arith.constant 0 : index
    %c0_1 = arith.constant 0 : index
    %0 = vector.load %arg3[%c0, %c0_0, %c0_1] : memref<2x2x1024xf32, #tpu.memory_space<vmem>>, vector<2x1x1024xf32>
    %1 = vector.shape_cast %0 : vector<2x1x1024xf32> to vector<2x1024xf32>
    %c0_2 = arith.constant 0 : index
    %c1 = arith.constant 1 : index
    %c0_3 = arith.constant 0 : index
    %2 = vector.load %arg3[%c0_2, %c1, %c0_3] : memref<2x2x1024xf32, #tpu.memory_space<vmem>>, vector<2x1x1024xf32>
    %3 = vector.shape_cast %2 : vector<2x1x1024xf32> to vector<2x1024xf32>
    %4 = tpu.iota {dimensions = array<i32: 0>} : vector<2x1024xi32>
    %c2_i32 = arith.constant 2 : i32
    %5 = arith.muli %arg0, %c2_i32 : i32
    %6 = vector.broadcast %5 : i32 to vector<2x1024xi32>
    %7 = arith.addi %4, %6 : vector<2x1024xi32>
    %8 = tpu.iota {dimensions = array<i32: 1>} : vector<2x1024xi32>
    %c1024_i32 = arith.constant 1024 : i32
    %9 = arith.muli %arg1, %c1024_i32 : i32
    %10 = vector.broadcast %9 : i32 to vector<2x1024xi32>
    %11 = arith.addi %8, %10 : vector<2x1024xi32>
    %c0_4 = arith.constant 0 : index
    %12 = memref.load %arg2[%c0_4] : memref<1xi32, #tpu.memory_space<smem>>
    %c-1640531527_i32 = arith.constant -1640531527 : i32
    %13 = vector.broadcast %c-1640531527_i32 : i32 to vector<2x1024xi32>
    %14 = arith.muli %7, %13 : vector<2x1024xi32>
    %c-2048144789_i32 = arith.constant -2048144789 : i32
    %15 = vector.broadcast %c-2048144789_i32 : i32 to vector<2x1024xi32>
    %16 = arith.muli %11, %15 : vector<2x1024xi32>
    %17 = arith.xori %14, %16 : vector<2x1024xi32>
    %c-1028477387_i32 = arith.constant -1028477387 : i32
    %18 = arith.muli %12, %c-1028477387_i32 : i32
    %19 = vector.broadcast %18 : i32 to vector<2x1024xi32>
    %20 = arith.xori %17, %19 : vector<2x1024xi32>
    %c16_i32 = arith.constant 16 : i32
    %21 = vector.broadcast %c16_i32 : i32 to vector<2x1024xi32>
    %22 = arith.shrsi %20, %21 : vector<2x1024xi32>
    %c65535_i32 = arith.constant 65535 : i32
    %23 = vector.broadcast %c65535_i32 : i32 to vector<2x1024xi32>
    %24 = arith.andi %22, %23 : vector<2x1024xi32>
    %25 = arith.xori %20, %24 : vector<2x1024xi32>
    %c-2048144789_i32_5 = arith.constant -2048144789 : i32
    %26 = vector.broadcast %c-2048144789_i32_5 : i32 to vector<2x1024xi32>
    %27 = arith.muli %25, %26 : vector<2x1024xi32>
    %c13_i32 = arith.constant 13 : i32
    %28 = vector.broadcast %c13_i32 : i32 to vector<2x1024xi32>
    %29 = arith.shrsi %27, %28 : vector<2x1024xi32>
    %c524287_i32 = arith.constant 524287 : i32
    %30 = vector.broadcast %c524287_i32 : i32 to vector<2x1024xi32>
    %31 = arith.andi %29, %30 : vector<2x1024xi32>
    %32 = arith.xori %27, %31 : vector<2x1024xi32>
    %c-1028477387_i32_6 = arith.constant -1028477387 : i32
    %33 = vector.broadcast %c-1028477387_i32_6 : i32 to vector<2x1024xi32>
    %34 = arith.muli %32, %33 : vector<2x1024xi32>
    %c16_i32_7 = arith.constant 16 : i32
    %35 = vector.broadcast %c16_i32_7 : i32 to vector<2x1024xi32>
    %36 = arith.shrsi %34, %35 : vector<2x1024xi32>
    %c65535_i32_8 = arith.constant 65535 : i32
    %37 = vector.broadcast %c65535_i32_8 : i32 to vector<2x1024xi32>
    %38 = arith.andi %36, %37 : vector<2x1024xi32>
    %39 = arith.xori %34, %38 : vector<2x1024xi32>
    %c668265263_i32 = arith.constant 668265263 : i32
    %40 = vector.broadcast %c668265263_i32 : i32 to vector<2x1024xi32>
    %41 = arith.xori %39, %40 : vector<2x1024xi32>
    %c16_i32_9 = arith.constant 16 : i32
    %42 = vector.broadcast %c16_i32_9 : i32 to vector<2x1024xi32>
    %43 = arith.shrsi %41, %42 : vector<2x1024xi32>
    %c65535_i32_10 = arith.constant 65535 : i32
    %44 = vector.broadcast %c65535_i32_10 : i32 to vector<2x1024xi32>
    %45 = arith.andi %43, %44 : vector<2x1024xi32>
    %46 = arith.xori %41, %45 : vector<2x1024xi32>
    %c-2048144789_i32_11 = arith.constant -2048144789 : i32
    %47 = vector.broadcast %c-2048144789_i32_11 : i32 to vector<2x1024xi32>
    %48 = arith.muli %46, %47 : vector<2x1024xi32>
    %c13_i32_12 = arith.constant 13 : i32
    %49 = vector.broadcast %c13_i32_12 : i32 to vector<2x1024xi32>
    %50 = arith.shrsi %48, %49 : vector<2x1024xi32>
    %c524287_i32_13 = arith.constant 524287 : i32
    %51 = vector.broadcast %c524287_i32_13 : i32 to vector<2x1024xi32>
    %52 = arith.andi %50, %51 : vector<2x1024xi32>
    %53 = arith.xori %48, %52 : vector<2x1024xi32>
    %c-1028477387_i32_14 = arith.constant -1028477387 : i32
    %54 = vector.broadcast %c-1028477387_i32_14 : i32 to vector<2x1024xi32>
    %55 = arith.muli %53, %54 : vector<2x1024xi32>
    %c16_i32_15 = arith.constant 16 : i32
    %56 = vector.broadcast %c16_i32_15 : i32 to vector<2x1024xi32>
    %57 = arith.shrsi %55, %56 : vector<2x1024xi32>
    %c65535_i32_16 = arith.constant 65535 : i32
    %58 = vector.broadcast %c65535_i32_16 : i32 to vector<2x1024xi32>
    %59 = arith.andi %57, %58 : vector<2x1024xi32>
    %60 = arith.xori %55, %59 : vector<2x1024xi32>
    %c8_i32 = arith.constant 8 : i32
    %61 = vector.broadcast %c8_i32 : i32 to vector<2x1024xi32>
    %62 = arith.shrsi %60, %61 : vector<2x1024xi32>
    %c16777215_i32 = arith.constant 16777215 : i32
    %63 = vector.broadcast %c16777215_i32 : i32 to vector<2x1024xi32>
    %64 = arith.andi %62, %63 : vector<2x1024xi32>
    %65 = arith.sitofp %64 : vector<2x1024xi32> to vector<2x1024xf32>
    %cst = arith.constant 5.000000e-01 : f32
    %66 = vector.broadcast %cst : f32 to vector<2x1024xf32>
    %67 = arith.addf %65, %66 : vector<2x1024xf32>
    %cst_17 = arith.constant 5.96046448E-8 : f32
    %68 = vector.broadcast %cst_17 : f32 to vector<2x1024xf32>
    %69 = arith.mulf %67, %68 : vector<2x1024xf32>
    %cst_18 = arith.constant 2.000000e+00 : f32
    %70 = vector.broadcast %cst_18 : f32 to vector<2x1024xf32>
    %71 = arith.mulf %70, %69 : vector<2x1024xf32>
    %cst_19 = arith.constant 1.000000e+00 : f32
    %72 = vector.broadcast %cst_19 : f32 to vector<2x1024xf32>
    %73 = arith.subf %71, %72 : vector<2x1024xf32>
    %cst_20 = arith.constant 1.000000e+00 : f32
    %74 = vector.broadcast %cst_20 : f32 to vector<2x1024xf32>
    %75 = arith.subf %74, %73 : vector<2x1024xf32>
    %cst_21 = arith.constant 1.000000e+00 : f32
    %76 = vector.broadcast %cst_21 : f32 to vector<2x1024xf32>
    %77 = arith.addf %76, %73 : vector<2x1024xf32>
    %78 = arith.mulf %75, %77 : vector<2x1024xf32>
    %79 = math.log %78 : vector<2x1024xf32>
    %cst_22 = arith.constant 0.000000e+00 : f32
    %80 = vector.broadcast %cst_22 : f32 to vector<2x1024xf32>
    %81 = arith.subf %80, %79 : vector<2x1024xf32>
    %cst_23 = arith.constant 9.99999997E-7 : f32
    %82 = vector.broadcast %cst_23 : f32 to vector<2x1024xf32>
    %83 = arith.maximumf %81, %82 : vector<2x1024xf32>
    %cst_24 = arith.constant 2.500000e+00 : f32
    %84 = vector.broadcast %cst_24 : f32 to vector<2x1024xf32>
    %85 = arith.subf %83, %84 : vector<2x1024xf32>
    %cst_25 = arith.constant 2.81022636E-8 : f32
    %86 = vector.broadcast %cst_25 : f32 to vector<2x1024xf32>
    %87 = arith.mulf %86, %85 : vector<2x1024xf32>
    %cst_26 = arith.constant 3.43273939E-7 : f32
    %88 = vector.broadcast %cst_26 : f32 to vector<2x1024xf32>
    %89 = arith.addf %87, %88 : vector<2x1024xf32>
    %90 = arith.mulf %89, %85 : vector<2x1024xf32>
    %cst_27 = arith.constant -3.5233877E-6 : f32
    %91 = vector.broadcast %cst_27 : f32 to vector<2x1024xf32>
    %92 = arith.addf %90, %91 : vector<2x1024xf32>
    %93 = arith.mulf %92, %85 : vector<2x1024xf32>
    %cst_28 = arith.constant -4.39150654E-6 : f32
    %94 = vector.broadcast %cst_28 : f32 to vector<2x1024xf32>
    %95 = arith.addf %93, %94 : vector<2x1024xf32>
    %96 = arith.mulf %95, %85 : vector<2x1024xf32>
    %cst_29 = arith.constant 2.1858087E-4 : f32
    %97 = vector.broadcast %cst_29 : f32 to vector<2x1024xf32>
    %98 = arith.addf %96, %97 : vector<2x1024xf32>
    %99 = arith.mulf %98, %85 : vector<2x1024xf32>
    %cst_30 = arith.constant -0.00125372503 : f32
    %100 = vector.broadcast %cst_30 : f32 to vector<2x1024xf32>
    %101 = arith.addf %99, %100 : vector<2x1024xf32>
    %102 = arith.mulf %101, %85 : vector<2x1024xf32>
    %cst_31 = arith.constant -0.00417768164 : f32
    %103 = vector.broadcast %cst_31 : f32 to vector<2x1024xf32>
    %104 = arith.addf %102, %103 : vector<2x1024xf32>
    %105 = arith.mulf %104, %85 : vector<2x1024xf32>
    %cst_32 = arith.constant 0.246640727 : f32
    %106 = vector.broadcast %cst_32 : f32 to vector<2x1024xf32>
    %107 = arith.addf %105, %106 : vector<2x1024xf32>
    %108 = arith.mulf %107, %85 : vector<2x1024xf32>
    %cst_33 = arith.constant 1.50140941 : f32
    %109 = vector.broadcast %cst_33 : f32 to vector<2x1024xf32>
    %110 = arith.addf %108, %109 : vector<2x1024xf32>
    %111 = math.sqrt %83 : vector<2x1024xf32>
    %cst_34 = arith.constant 3.000000e+00 : f32
    %112 = vector.broadcast %cst_34 : f32 to vector<2x1024xf32>
    %113 = arith.subf %111, %112 : vector<2x1024xf32>
    %cst_35 = arith.constant -2.00214257E-4 : f32
    %114 = vector.broadcast %cst_35 : f32 to vector<2x1024xf32>
    %115 = arith.mulf %114, %113 : vector<2x1024xf32>
    %cst_36 = arith.constant 1.00950558E-4 : f32
    %116 = vector.broadcast %cst_36 : f32 to vector<2x1024xf32>
    %117 = arith.addf %115, %116 : vector<2x1024xf32>
    %118 = arith.mulf %117, %113 : vector<2x1024xf32>
    %cst_37 = arith.constant 0.00134934322 : f32
    %119 = vector.broadcast %cst_37 : f32 to vector<2x1024xf32>
    %120 = arith.addf %118, %119 : vector<2x1024xf32>
    %121 = arith.mulf %120, %113 : vector<2x1024xf32>
    %cst_38 = arith.constant -0.00367342844 : f32
    %122 = vector.broadcast %cst_38 : f32 to vector<2x1024xf32>
    %123 = arith.addf %121, %122 : vector<2x1024xf32>
    %124 = arith.mulf %123, %113 : vector<2x1024xf32>
    %cst_39 = arith.constant 0.00573950773 : f32
    %125 = vector.broadcast %cst_39 : f32 to vector<2x1024xf32>
    %126 = arith.addf %124, %125 : vector<2x1024xf32>
    %127 = arith.mulf %126, %113 : vector<2x1024xf32>
    %cst_40 = arith.constant -0.0076224613 : f32
    %128 = vector.broadcast %cst_40 : f32 to vector<2x1024xf32>
    %129 = arith.addf %127, %128 : vector<2x1024xf32>
    %130 = arith.mulf %129, %113 : vector<2x1024xf32>
    %cst_41 = arith.constant 0.00943887047 : f32
    %131 = vector.broadcast %cst_41 : f32 to vector<2x1024xf32>
    %132 = arith.addf %130, %131 : vector<2x1024xf32>
    %133 = arith.mulf %132, %113 : vector<2x1024xf32>
    %cst_42 = arith.constant 1.00167406 : f32
    %134 = vector.broadcast %cst_42 : f32 to vector<2x1024xf32>
    %135 = arith.addf %133, %134 : vector<2x1024xf32>
    %136 = arith.mulf %135, %113 : vector<2x1024xf32>
    %cst_43 = arith.constant 2.83297682 : f32
    %137 = vector.broadcast %cst_43 : f32 to vector<2x1024xf32>
    %138 = arith.addf %136, %137 : vector<2x1024xf32>
    %cst_44 = arith.constant 5.000000e+00 : f32
    %139 = vector.broadcast %cst_44 : f32 to vector<2x1024xf32>
    %140 = arith.cmpf olt, %83, %139 : vector<2x1024xf32>
    %141 = arith.select %140, %110, %138 : vector<2x1024xi1>, vector<2x1024xf32>
    %142 = arith.mulf %141, %73 : vector<2x1024xf32>
    %cst_45 = arith.constant 1.41421354 : f32
    %143 = vector.broadcast %cst_45 : f32 to vector<2x1024xf32>
    %144 = arith.mulf %143, %142 : vector<2x1024xf32>
    %cst_46 = arith.constant 9.99999997E-7 : f32
    %145 = vector.broadcast %cst_46 : f32 to vector<2x1024xf32>
    %146 = arith.addf %3, %145 : vector<2x1024xf32>
    %147 = math.sqrt %146 : vector<2x1024xf32>
    %148 = arith.mulf %147, %144 : vector<2x1024xf32>
    %149 = arith.addf %1, %148 : vector<2x1024xf32>
    %c0_47 = arith.constant 0 : index
    %c0_48 = arith.constant 0 : index
    %150 = vector.load %arg4[%c0_47, %c0_48] : memref<2x1024xf32, #tpu.memory_space<vmem>>, vector<2x1024xf32>
    tpu.vector_store %arg4[%c0_47, %c0_48], %149 {strides = array<i32>} : memref<2x1024xf32, #tpu.memory_space<vmem>>, vector<2x1024xf32>,
    return
  }
  func.func @transform_0(%arg0: i32, %arg1: i32, %arg2: memref<1xi32, #tpu.memory_space<smem>>) -> (i32, i32, i32) {
    %c0_i32 = arith.constant 0 : i32
    %c0_i32_0 = arith.constant 0 : i32
    return %arg0, %c0_i32, %arg1 : i32, i32, i32
  }
  func.func @transform_1(%arg0: i32, %arg1: i32, %arg2: memref<1xi32, #tpu.memory_space<smem>>) -> (i32, i32) {
    %c0_i32 = arith.constant 0 : i32
    return %arg0, %arg1 : i32, i32
  }
}

</mosaic_0001>

<llo_original>
// kernel: _local_reparam_2d.1
$region0: #{_local_reparam_2d.1}
  #allocation0 [shape = 'u32[]', space=smem, size = 0x4, offset = 0x4, fixed_abs, tag = 'smem constant byte address 0x4 - core index']
  #allocation1 [shape = 'u32[72,128]{1,0:T(1,128)}', space=vmem, size = 0x9000, scoped, tag = 'internal scratch']
  #allocation2 [shape = 's32[1]{0}', space=sflag, size = 0x4, scoped, tag = 'scoped memory for _local_reparam_2d.1']
  #allocation3 [shape = 's32[1]{0:T(128)S(6)}', space=smem, size = 0x200, scoped, tag = 'prefetched SMEM operand 0']
  %s0 = inlined_call_operand.<no memory space> [shape: s32[1], index: 0, kind: input, shape index: {}]
  %s1 = inlined_call_operand.hbm [shape: f32[2,2,1024], index: 1, kind: input, shape index: {}]
  %s2 = inlined_call_operand.hbm [shape: f32[2,1024], index: 2, kind: output, shape index: {}]
  %s3 = sld [smem:[#allocation0]]
  $region18: #{_local_reparam_2d.1} parent=0
    _
  %s5 = ssub.s32 1, %s3
  %s6 = scalar_select 0, %s5, %s3
  %7 = sst [smem:[#allocation3]] %s0
  $region1: #{_local_reparam_2d.1} parent=0
    #allocation4 [shape = 'u8[16384]{0}', space=vmem, size = 0x4000, scoped, tag = 'input window, operand 1, single buffered']
    #allocation5 [shape = 's32[1]{0}', space=sflag, size = 0x4, scoped, tag = 'scoped memory for _local_reparam_2d.1']
    #allocation6 [shape = 's32[1]{0}', space=sflag, size = 0x4, scoped, tag = 'scoped memory for _local_reparam_2d.1']
    #allocation7 [shape = 'u8[8192]{0}', space=vmem, size = 0x2000, scoped, tag = 'output window, operand 0, single buffered']
    %8 = vsyncpa [#allocation5], 0
    %9 = vsyncpa [#allocation6], 0
    // Predicated region
    $region2: #{_local_reparam_2d.1} parent=1 // pred_check
      _
    $region3: #{_local_reparam_2d.1} parent=1 // pred_check_branch
      %11 = sbr.rel (0) target = $region5
    $region4: #{_local_reparam_2d.1} parent=1 // pred_region
      %13 = vsyncadd [#allocation5], 0
      %s14 = sshll.u32 %s1, 4
      %s15 = int_to_ptr.hbm [resolvable:$true] %s14
      %s16 = sshll.u32 [#allocation4], 4
      %s17 = int_to_ptr.vmem [resolvable:$true] %s16
      %22 = dma.hbm_to_vmem [thread:$0]  %s15, 512, %s17, [#allocation5], 256, 256, 16
    $region5: #{_local_reparam_2d.1} parent=1 // pred_fallthru
      _
    // Predicated region
    $region6: #{_local_reparam_2d.1} parent=1 // pred_check
      _
    $region7: #{_local_reparam_2d.1} parent=1 // pred_check_branch
      %24 = sbr.rel (0) target = $region9
    $region8: #{_local_reparam_2d.1} parent=1 // pred_region
      %26 = dma.done [#allocation5], 512
    $region9: #{_local_reparam_2d.1} parent=1 // pred_fallthru
      _
    %v27 = vld [vmem:[#allocation4] ss:$2 sm:$0xff]
    %s28 = scalar_lea.vmem [#allocation4], 16
    %v29 = vld [vmem:[%s28] ss:$2 sm:$0xff]
    %s30 = scalar_lea.vmem [#allocation4], 1
    %v31 = vld [vmem:[%s30] ss:$2 sm:$0xff]
    %s32 = scalar_lea.vmem [#allocation4], 17
    %v33 = vld [vmem:[%s32] ss:$2 sm:$0xff]
    %v34 = vlaneseq
    %v35 = vshrl.u32 %v34, 7
    %s36 = smul.u32 0, 2
    %v37 = vstv %s36
    %v38 = vadd.s32 %v35, %v37
    %v39 = vlaneseq
    %v40 = vand.u32 %v39, 127
    %v41 = vadd.s32 %v40, 128
    %v42 = vadd.s32 %v40, 256
    %v43 = vadd.s32 %v40, 384
    %v44 = vadd.s32 %v40, 512
    %v45 = vadd.s32 %v40, 640
    %v46 = vadd.s32 %v40, 768
    %v47 = vadd.s32 %v40, 896
    %s48 = smul.u32 0, 1024
    %v49 = vstv %s48
    %v50 = vadd.s32 %v40, %v49
    %v51 = vadd.s32 %v41, %v49
    %v52 = vadd.s32 %v42, %v49
    %v53 = vadd.s32 %v43, %v49
    %v54 = vadd.s32 %v44, %v49
    %v55 = vadd.s32 %v45, %v49
    %v56 = vadd.s32 %v46, %v49
    %v57 = vadd.s32 %v47, %v49
    %s58 = sld [smem:[#allocation3]]
    %v59 = vmul.u32 %v38, 2654435769
    %v60 = vmul.u32 %v50, 2246822507
    %v61 = vmul.u32 %v51, 2246822507
    %v62 = vmul.u32 %v52, 2246822507
    %v63 = vmul.u32 %v53, 2246822507
    %v64 = vmul.u32 %v54, 2246822507
    %v65 = vmul.u32 %v55, 2246822507
    %v66 = vmul.u32 %v56, 2246822507
    %v67 = vmul.u32 %v57, 2246822507
    %v68 = vxor.u32 %v59, %v60
    %v69 = vxor.u32 %v59, %v61
    %v70 = vxor.u32 %v59, %v62
    %v71 = vxor.u32 %v59, %v63
    %v72 = vxor.u32 %v59, %v64
    %v73 = vxor.u32 %v59, %v65
    %v74 = vxor.u32 %v59, %v66
    %v75 = vxor.u32 %v59, %v67
    %s76 = smul.u32 %s58, 3266489909
    %v77 = vstv %s76
    %v78 = vxor.u32 %v68, %v77
    %v79 = vxor.u32 %v69, %v77
    %v80 = vxor.u32 %v70, %v77
    %v81 = vxor.u32 %v71, %v77
    %v82 = vxor.u32 %v72, %v77
    %v83 = vxor.u32 %v73, %v77
    %v84 = vxor.u32 %v74, %v77
    %v85 = vxor.u32 %v75, %v77
    %v86 = vshra.s32 %v78, 16
    %v87 = vshra.s32 %v79, 16
    %v88 = vshra.s32 %v80, 16
    %v89 = vshra.s32 %v81, 16
    %v90 = vshra.s32 %v82, 16
    %v91 = vshra.s32 %v83, 16
    %v92 = vshra.s32 %v84, 16
    %v93 = vshra.s32 %v85, 16
    %v94 = vand.u32 %v86, 65535
    %v95 = vand.u32 %v87, 65535
    %v96 = vand.u32 %v88, 65535
    %v97 = vand.u32 %v89, 65535
    %v98 = vand.u32 %v90, 65535
    %v99 = vand.u32 %v91, 65535
    %v100 = vand.u32 %v92, 65535
    %v101 = vand.u32 %v93, 65535
    %v102 = vxor.u32 %v78, %v94
    %v103 = vxor.u32 %v79, %v95
    %v104 = vxor.u32 %v80, %v96
    %v105 = vxor.u32 %v81, %v97
    %v106 = vxor.u32 %v82, %v98
    %v107 = vxor.u32 %v83, %v99
    %v108 = vxor.u32 %v84, %v100
    %v109 = vxor.u32 %v85, %v101
    %v110 = vmul.u32 %v102, 2246822507
    %v111 = vmul.u32 %v103, 2246822507
    %v112 = vmul.u32 %v104, 2246822507
    %v113 = vmul.u32 %v105, 2246822507
    %v114 = vmul.u32 %v106, 2246822507
    %v115 = vmul.u32 %v107, 2246822507
    %v116 = vmul.u32 %v108, 2246822507
    %v117 = vmul.u32 %v109, 2246822507
    %v118 = vshra.s32 %v110, 13
    %v119 = vshra.s32 %v111, 13
    %v120 = vshra.s32 %v112, 13
    %v121 = vshra.s32 %v113, 13
    %v122 = vshra.s32 %v114, 13
    %v123 = vshra.s32 %v115, 13
    %v124 = vshra.s32 %v116, 13
    %v125 = vshra.s32 %v117, 13
    %v126 = vand.u32 %v118, 524287
    %v127 = vand.u32 %v119, 524287
    %v128 = vand.u32 %v120, 524287
    %v129 = vand.u32 %v121, 524287
    %v130 = vand.u32 %v122, 524287
    %v131 = vand.u32 %v123, 524287
    %v132 = vand.u32 %v124, 524287
    %v133 = vand.u32 %v125, 524287
    %v134 = vxor.u32 %v110, %v126
    %v135 = vxor.u32 %v111, %v127
    %v136 = vxor.u32 %v112, %v128
    %v137 = vxor.u32 %v113, %v129
    %v138 = vxor.u32 %v114, %v130
    %v139 = vxor.u32 %v115, %v131
    %v140 = vxor.u32 %v116, %v132
    %v141 = vxor.u32 %v117, %v133
    %v142 = vmul.u32 %v134, 3266489909
    %v143 = vmul.u32 %v135, 3266489909
    %v144 = vmul.u32 %v136, 3266489909
    %v145 = vmul.u32 %v137, 3266489909
    %v146 = vmul.u32 %v138, 3266489909
    %v147 = vmul.u32 %v139, 3266489909
    %v148 = vmul.u32 %v140, 3266489909
    %v149 = vmul.u32 %v141, 3266489909
    %v150 = vshra.s32 %v142, 16
    %v151 = vshra.s32 %v143, 16
    %v152 = vshra.s32 %v144, 16
    %v153 = vshra.s32 %v145, 16
    %v154 = vshra.s32 %v146, 16
    %v155 = vshra.s32 %v147, 16
    %v156 = vshra.s32 %v148, 16
    %v157 = vshra.s32 %v149, 16
    %v158 = vand.u32 %v150, 65535
    %v159 = vand.u32 %v151, 65535
    %v160 = vand.u32 %v152, 65535
    %v161 = vand.u32 %v153, 65535
    %v162 = vand.u32 %v154, 65535
    %v163 = vand.u32 %v155, 65535
    %v164 = vand.u32 %v156, 65535
    %v165 = vand.u32 %v157, 65535
    %v166 = vxor.u32 %v142, %v158
    %v167 = vxor.u32 %v143, %v159
    %v168 = vxor.u32 %v144, %v160
    %v169 = vxor.u32 %v145, %v161
    %v170 = vxor.u32 %v146, %v162
    %v171 = vxor.u32 %v147, %v163
    %v172 = vxor.u32 %v148, %v164
    %v173 = vxor.u32 %v149, %v165
    %v174 = vxor.u32 %v166, 668265263
    %v175 = vxor.u32 %v167, 668265263
    %v176 = vxor.u32 %v168, 668265263
    %v177 = vxor.u32 %v169, 668265263
    %v178 = vxor.u32 %v170, 668265263
    %v179 = vxor.u32 %v171, 668265263
    %v180 = vxor.u32 %v172, 668265263
    %v181 = vxor.u32 %v173, 668265263
    %v182 = vshra.s32 %v174, 16
    %v183 = vshra.s32 %v175, 16
    %v184 = vshra.s32 %v176, 16
    %v185 = vshra.s32 %v177, 16
    %v186 = vshra.s32 %v178, 16
    %v187 = vshra.s32 %v179, 16
    %v188 = vshra.s32 %v180, 16
    %v189 = vshra.s32 %v181, 16
    %v190 = vand.u32 %v182, 65535
    %v191 = vand.u32 %v183, 65535
    %v192 = vand.u32 %v184, 65535
    %v193 = vand.u32 %v185, 65535
    %v194 = vand.u32 %v186, 65535
    %v195 = vand.u32 %v187, 65535
    %v196 = vand.u32 %v188, 65535
    %v197 = vand.u32 %v189, 65535
    %v198 = vxor.u32 %v174, %v190
    %v199 = vxor.u32 %v175, %v191
    %v200 = vxor.u32 %v176, %v192
    %v201 = vxor.u32 %v177, %v193
    %v202 = vxor.u32 %v178, %v194
    %v203 = vxor.u32 %v179, %v195
    %v204 = vxor.u32 %v180, %v196
    %v205 = vxor.u32 %v181, %v197
    %v206 = vmul.u32 %v198, 2246822507
    %v207 = vmul.u32 %v199, 2246822507
    %v208 = vmul.u32 %v200, 2246822507
    %v209 = vmul.u32 %v201, 2246822507
    %v210 = vmul.u32 %v202, 2246822507
    %v211 = vmul.u32 %v203, 2246822507
    %v212 = vmul.u32 %v204, 2246822507
    %v213 = vmul.u32 %v205, 2246822507
    %v214 = vshra.s32 %v206, 13
    %v215 = vshra.s32 %v207, 13
    %v216 = vshra.s32 %v208, 13
    %v217 = vshra.s32 %v209, 13
    %v218 = vshra.s32 %v210, 13
    %v219 = vshra.s32 %v211, 13
    %v220 = vshra.s32 %v212, 13
    %v221 = vshra.s32 %v213, 13
    %v222 = vand.u32 %v214, 524287
    %v223 = vand.u32 %v215, 524287
    %v224 = vand.u32 %v216, 524287
    %v225 = vand.u32 %v217, 524287
    %v226 = vand.u32 %v218, 524287
    %v227 = vand.u32 %v219, 524287
    %v228 = vand.u32 %v220, 524287
    %v229 = vand.u32 %v221, 524287
    %v230 = vxor.u32 %v206, %v222
    %v231 = vxor.u32 %v207, %v223
    %v232 = vxor.u32 %v208, %v224
    %v233 = vxor.u32 %v209, %v225
    %v234 = vxor.u32 %v210, %v226
    %v235 = vxor.u32 %v211, %v227
    %v236 = vxor.u32 %v212, %v228
    %v237 = vxor.u32 %v213, %v229
    %v238 = vmul.u32 %v230, 3266489909
    %v239 = vmul.u32 %v231, 3266489909
    %v240 = vmul.u32 %v232, 3266489909
    %v241 = vmul.u32 %v233, 3266489909
    %v242 = vmul.u32 %v234, 3266489909
    %v243 = vmul.u32 %v235, 3266489909
    %v244 = vmul.u32 %v236, 3266489909
    %v245 = vmul.u32 %v237, 3266489909
    %v246 = vshra.s32 %v238, 16
    %v247 = vshra.s32 %v239, 16
    %v248 = vshra.s32 %v240, 16
    %v249 = vshra.s32 %v241, 16
    %v250 = vshra.s32 %v242, 16
    %v251 = vshra.s32 %v243, 16
    %v252 = vshra.s32 %v244, 16
    %v253 = vshra.s32 %v245, 16
    %v254 = vand.u32 %v246, 65535
    %v255 = vand.u32 %v247, 65535
    %v256 = vand.u32 %v248, 65535
    %v257 = vand.u32 %v249, 65535
    %v258 = vand.u32 %v250, 65535
    %v259 = vand.u32 %v251, 65535
    %v260 = vand.u32 %v252, 65535
    %v261 = vand.u32 %v253, 65535
    %v262 = vxor.u32 %v238, %v254
    %v263 = vxor.u32 %v239, %v255
    %v264 = vxor.u32 %v240, %v256
    %v265 = vxor.u32 %v241, %v257
    %v266 = vxor.u32 %v242, %v258
    %v267 = vxor.u32 %v243, %v259
    %v268 = vxor.u32 %v244, %v260
    %v269 = vxor.u32 %v245, %v261
    %v270 = vshra.s32 %v262, 8
    %v271 = vshra.s32 %v263, 8
    %v272 = vshra.s32 %v264, 8
    %v273 = vshra.s32 %v265, 8
    %v274 = vshra.s32 %v266, 8
    %v275 = vshra.s32 %v267, 8
    %v276 = vshra.s32 %v268, 8
    %v277 = vshra.s32 %v269, 8
    %v278 = vand.u32 %v270, 16777215
    %v279 = vand.u32 %v271, 16777215
    %v280 = vand.u32 %v272, 16777215
    %v281 = vand.u32 %v273, 16777215
    %v282 = vand.u32 %v274, 16777215
    %v283 = vand.u32 %v275, 16777215
    %v284 = vand.u32 %v276, 16777215
    %v285 = vand.u32 %v277, 16777215
    %v286 = vcvt.s32.f32 %v278
    %v287 = vcvt.s32.f32 %v279
    %v288 = vcvt.s32.f32 %v280
    %v289 = vcvt.s32.f32 %v281
    %v290 = vcvt.s32.f32 %v282
    %v291 = vcvt.s32.f32 %v283
    %v292 = vcvt.s32.f32 %v284
    %v293 = vcvt.s32.f32 %v285
    %v294 = vadd.f32 %v286, 0.5
    %v295 = vadd.f32 %v287, 0.5
    %v296 = vadd.f32 %v288, 0.5
    %v297 = vadd.f32 %v289, 0.5
    %v298 = vadd.f32 %v290, 0.5
    %v299 = vadd.f32 %v291, 0.5
    %v300 = vadd.f32 %v292, 0.5
    %v301 = vadd.f32 %v293, 0.5
    %v302 = vmul.f32 %v294, 5.9604645e-08
    %v303 = vmul.f32 %v295, 5.9604645e-08
    %v304 = vmul.f32 %v296, 5.9604645e-08
    %v305 = vmul.f32 %v297, 5.9604645e-08
    %v306 = vmul.f32 %v298, 5.9604645e-08
    %v307 = vmul.f32 %v299, 5.9604645e-08
    %v308 = vmul.f32 %v300, 5.9604645e-08
    %v309 = vmul.f32 %v301, 5.9604645e-08
    %v310 = vmul.f32 %v302, 2.0
    %v311 = vmul.f32 %v303, 2.0
    %v312 = vmul.f32 %v304, 2.0
    %v313 = vmul.f32 %v305, 2.0
    %v314 = vmul.f32 %v306, 2.0
    %v315 = vmul.f32 %v307, 2.0
    %v316 = vmul.f32 %v308, 2.0
    %v317 = vmul.f32 %v309, 2.0
    %v318 = vsub.f32 %v310, 1.0
    %v319 = vsub.f32 %v311, 1.0
    %v320 = vsub.f32 %v312, 1.0
    %v321 = vsub.f32 %v313, 1.0
    %v322 = vsub.f32 %v314, 1.0
    %v323 = vsub.f32 %v315, 1.0
    %v324 = vsub.f32 %v316, 1.0
    %v325 = vsub.f32 %v317, 1.0
    %v326 = vsub.f32 1.0, %v318
    %v327 = vsub.f32 1.0, %v319
    %v328 = vsub.f32 1.0, %v320
    %v329 = vsub.f32 1.0, %v321
    %v330 = vsub.f32 1.0, %v322
    %v331 = vsub.f32 1.0, %v323
    %v332 = vsub.f32 1.0, %v324
    %v333 = vsub.f32 1.0, %v325
    %v334 = vadd.f32 %v318, 1.0
    %v335 = vadd.f32 %v319, 1.0
    %v336 = vadd.f32 %v320, 1.0
    %v337 = vadd.f32 %v321, 1.0
    %v338 = vadd.f32 %v322, 1.0
    %v339 = vadd.f32 %v323, 1.0
    %v340 = vadd.f32 %v324, 1.0
    %v341 = vadd.f32 %v325, 1.0
    %v342 = vmul.f32 %v326, %v334
    %v343 = vmul.f32 %v327, %v335
    %v344 = vmul.f32 %v328, %v336
    %v345 = vmul.f32 %v329, %v337
    %v346 = vmul.f32 %v330, %v338
    %v347 = vmul.f32 %v331, %v339
    %v348 = vmul.f32 %v332, %v340
    %v349 = vmul.f32 %v333, %v341
    %v350 = vlog2.pop %v342
    %v351 = vmul.f32 %v350, 0.6931472
    %v352 = vlog2.pop %v343
    %v353 = vmul.f32 %v352, 0.6931472
    %v354 = vlog2.pop %v344
    %v355 = vmul.f32 %v354, 0.6931472
    %v356 = vlog2.pop %v345
    %v357 = vmul.f32 %v356, 0.6931472
    %v358 = vlog2.pop %v346
    %v359 = vmul.f32 %v358, 0.6931472
    %v360 = vlog2.pop %v347
    %v361 = vmul.f32 %v360, 0.6931472
    %v362 = vlog2.pop %v348
    %v363 = vmul.f32 %v362, 0.6931472
    %v364 = vlog2.pop %v349
    %v365 = vmul.f32 %v364, 0.6931472
    %v366 = vsub.f32 0.0, %v351
    %v367 = vsub.f32 0.0, %v353
    %v368 = vsub.f32 0.0, %v355
    %v369 = vsub.f32 0.0, %v357
    %v370 = vsub.f32 0.0, %v359
    %v371 = vsub.f32 0.0, %v361
    %v372 = vsub.f32 0.0, %v363
    %v373 = vsub.f32 0.0, %v365
    %v374 = vmax.f32 %v366, 1e-06
    %v375 = vmax.f32 %v367, 1e-06
    %v376 = vmax.f32 %v368, 1e-06
    %v377 = vmax.f32 %v369, 1e-06
    %v378 = vmax.f32 %v370, 1e-06
    %v379 = vmax.f32 %v371, 1e-06
    %v380 = vmax.f32 %v372, 1e-06
    %v381 = vmax.f32 %v373, 1e-06
    %v382 = vsub.f32 %v374, 2.5
    %v383 = vsub.f32 %v375, 2.5
    %v384 = vsub.f32 %v376, 2.5
    %v385 = vsub.f32 %v377, 2.5
    %v386 = vsub.f32 %v378, 2.5
    %v387 = vsub.f32 %v379, 2.5
    %v388 = vsub.f32 %v380, 2.5
    %v389 = vsub.f32 %v381, 2.5
    %v390 = vmul.f32 %v382, 2.8102264e-08
    %v391 = vmul.f32 %v383, 2.8102264e-08
    %v392 = vmul.f32 %v384, 2.8102264e-08
    %v393 = vmul.f32 %v385, 2.8102264e-08
    %v394 = vmul.f32 %v386, 2.8102264e-08
    %v395 = vmul.f32 %v387, 2.8102264e-08
    %v396 = vmul.f32 %v388, 2.8102264e-08
    %v397 = vmul.f32 %v389, 2.8102264e-08
    %v398 = vadd.f32 %v390, 3.4327394e-07
    %v399 = vadd.f32 %v391, 3.4327394e-07
    %v400 = vadd.f32 %v392, 3.4327394e-07
    %v401 = vadd.f32 %v393, 3.4327394e-07
    %v402 = vadd.f32 %v394, 3.4327394e-07
    %v403 = vadd.f32 %v395, 3.4327394e-07
    %v404 = vadd.f32 %v396, 3.4327394e-07
    %v405 = vadd.f32 %v397, 3.4327394e-07
    %v406 = vmul.f32 %v398, %v382
    %v407 = vmul.f32 %v399, %v383
    %v408 = vmul.f32 %v400, %v384
    %v409 = vmul.f32 %v401, %v385
    %v410 = vmul.f32 %v402, %v386
    %v411 = vmul.f32 %v403, %v387
    %v412 = vmul.f32 %v404, %v388
    %v413 = vmul.f32 %v405, %v389
    %v414 = vadd.f32 %v406, -3.5233877e-06
    %v415 = vadd.f32 %v407, -3.5233877e-06
    %v416 = vadd.f32 %v408, -3.5233877e-06
    %v417 = vadd.f32 %v409, -3.5233877e-06
    %v418 = vadd.f32 %v410, -3.5233877e-06
    %v419 = vadd.f32 %v411, -3.5233877e-06
    %v420 = vadd.f32 %v412, -3.5233877e-06
    %v421 = vadd.f32 %v413, -3.5233877e-06
    %v422 = vmul.f32 %v414, %v382
    %v423 = vmul.f32 %v415, %v383
    %v424 = vmul.f32 %v416, %v384
    %v425 = vmul.f32 %v417, %v385
    %v426 = vmul.f32 %v418, %v386
    %v427 = vmul.f32 %v419, %v387
    %v428 = vmul.f32 %v420, %v388
    %v429 = vmul.f32 %v421, %v389
    %v430 = vadd.f32 %v422, -4.3915065e-06
    %v431 = vadd.f32 %v423, -4.3915065e-06
    %v432 = vadd.f32 %v424, -4.3915065e-06
    %v433 = vadd.f32 %v425, -4.3915065e-06
    %v434 = vadd.f32 %v426, -4.3915065e-06
    %v435 = vadd.f32 %v427, -4.3915065e-06
    %v436 = vadd.f32 %v428, -4.3915065e-06
    %v437 = vadd.f32 %v429, -4.3915065e-06
    %v438 = vmul.f32 %v430, %v382
    %v439 = vmul.f32 %v431, %v383
    %v440 = vmul.f32 %v432, %v384
    %v441 = vmul.f32 %v433, %v385
    %v442 = vmul.f32 %v434, %v386
    %v443 = vmul.f32 %v435, %v387
    %v444 = vmul.f32 %v436, %v388
    %v445 = vmul.f32 %v437, %v389
    %v446 = vadd.f32 %v438, 0.00021858087
    %v447 = vadd.f32 %v439, 0.00021858087
    %v448 = vadd.f32 %v440, 0.00021858087
    %v449 = vadd.f32 %v441, 0.00021858087
    %v450 = vadd.f32 %v442, 0.00021858087
    %v451 = vadd.f32 %v443, 0.00021858087
    %v452 = vadd.f32 %v444, 0.00021858087
    %v453 = vadd.f32 %v445, 0.00021858087
    %v454 = vmul.f32 %v446, %v382
    %v455 = vmul.f32 %v447, %v383
    %v456 = vmul.f32 %v448, %v384
    %v457 = vmul.f32 %v449, %v385
    %v458 = vmul.f32 %v450, %v386
    %v459 = vmul.f32 %v451, %v387
    %v460 = vmul.f32 %v452, %v388
    %v461 = vmul.f32 %v453, %v389
    %v462 = vadd.f32 %v454, -0.001253725
    %v463 = vadd.f32 %v455, -0.001253725
    %v464 = vadd.f32 %v456, -0.001253725
    %v465 = vadd.f32 %v457, -0.001253725
    %v466 = vadd.f32 %v458, -0.001253725
    %v467 = vadd.f32 %v459, -0.001253725
    %v468 = vadd.f32 %v460, -0.001253725
    %v469 = vadd.f32 %v461, -0.001253725
    %v470 = vmul.f32 %v462, %v382
    %v471 = vmul.f32 %v463, %v383
    %v472 = vmul.f32 %v464, %v384
    %v473 = vmul.f32 %v465, %v385
    %v474 = vmul.f32 %v466, %v386
    %v475 = vmul.f32 %v467, %v387
    %v476 = vmul.f32 %v468, %v388
    %v477 = vmul.f32 %v469, %v389
    %v478 = vadd.f32 %v470, -0.0041776816
    %v479 = vadd.f32 %v471, -0.0041776816
    %v480 = vadd.f32 %v472, -0.0041776816
    %v481 = vadd.f32 %v473, -0.0041776816
    %v482 = vadd.f32 %v474, -0.0041776816
    %v483 = vadd.f32 %v475, -0.0041776816
    %v484 = vadd.f32 %v476, -0.0041776816
    %v485 = vadd.f32 %v477, -0.0041776816
    %v486 = vmul.f32 %v478, %v382
    %v487 = vmul.f32 %v479, %v383
    %v488 = vmul.f32 %v480, %v384
    %v489 = vmul.f32 %v481, %v385
    %v490 = vmul.f32 %v482, %v386
    %v491 = vmul.f32 %v483, %v387
    %v492 = vmul.f32 %v484, %v388
    %v493 = vmul.f32 %v485, %v389
    %v494 = vadd.f32 %v486, 0.24664073
    %v495 = vadd.f32 %v487, 0.24664073
    %v496 = vadd.f32 %v488, 0.24664073
    %v497 = vadd.f32 %v489, 0.24664073
    %v498 = vadd.f32 %v490, 0.24664073
    %v499 = vadd.f32 %v491, 0.24664073
    %v500 = vadd.f32 %v492, 0.24664073
    %v501 = vadd.f32 %v493, 0.24664073
    %v502 = vmul.f32 %v494, %v382
    %v503 = vmul.f32 %v495, %v383
    %v504 = vmul.f32 %v496, %v384
    %v505 = vmul.f32 %v497, %v385
    %v506 = vmul.f32 %v498, %v386
    %v507 = vmul.f32 %v499, %v387
    %v508 = vmul.f32 %v500, %v388
    %v509 = vmul.f32 %v501, %v389
    %v510 = vadd.f32 %v502, 1.5014094
    %v511 = vadd.f32 %v503, 1.5014094
    %v512 = vadd.f32 %v504, 1.5014094
    %v513 = vadd.f32 %v505, 1.5014094
    %v514 = vadd.f32 %v506, 1.5014094
    %v515 = vadd.f32 %v507, 1.5014094
    %v516 = vadd.f32 %v508, 1.5014094
    %v517 = vadd.f32 %v509, 1.5014094
    %v518 = vrsqrt.pop %v374
    %v519 = vmul.f32 %v518, %v374
    %v520 = vmul.f32 %v519, %v518
    %v521 = vmul.f32 0.5, %v520
    %v522 = vsub.f32 1.5, %v521
    %v523 = vmul.f32 %v518, %v522
    %v524 = vmul.f32 %v374, %v523
    %vm525 = vcmp.eq.f32.partialorder %v374, inf
    %v526 = vsel %vm525, %v374, %v524
    %vm527 = vcmp.eq.f32.partialorder %v374, 0.0
    %v528 = vand.u32 %v374, 2147483648
    %v529 = vsel %vm527, %v528, %v526
    %v530 = vrsqrt.pop %v375
    %v531 = vmul.f32 %v530, %v375
    %v532 = vmul.f32 %v531, %v530
    %v533 = vmul.f32 0.5, %v532
    %v534 = vsub.f32 1.5, %v533
    %v535 = vmul.f32 %v530, %v534
    %v536 = vmul.f32 %v375, %v535
    %vm537 = vcmp.eq.f32.partialorder %v375, inf
    %v538 = vsel %vm537, %v375, %v536
    %vm539 = vcmp.eq.f32.partialorder %v375, 0.0
    %v540 = vand.u32 %v375, 2147483648
    %v541 = vsel %vm539, %v540, %v538
    %v542 = vrsqrt.pop %v376
    %v543 = vmul.f32 %v542, %v376
    %v544 = vmul.f32 %v543, %v542
    %v545 = vmul.f32 0.5, %v544
    %v546 = vsub.f32 1.5, %v545
    %v547 = vmul.f32 %v542, %v546
    %v548 = vmul.f32 %v376, %v547
    %vm549 = vcmp.eq.f32.partialorder %v376, inf
    %v550 = vsel %vm549, %v376, %v548
    %vm551 = vcmp.eq.f32.partialorder %v376, 0.0
    %v552 = vand.u32 %v376, 2147483648
    %v553 = vsel %vm551, %v552, %v550
    %v554 = vrsqrt.pop %v377
    %v555 = vmul.f32 %v554, %v377
    %v556 = vmul.f32 %v555, %v554
    %v557 = vmul.f32 0.5, %v556
    %v558 = vsub.f32 1.5, %v557
    %v559 = vmul.f32 %v554, %v558
    %v560 = vmul.f32 %v377, %v559
    %vm561 = vcmp.eq.f32.partialorder %v377, inf
    %v562 = vsel %vm561, %v377, %v560
    %vm563 = vcmp.eq.f32.partialorder %v377, 0.0
    %v564 = vand.u32 %v377, 2147483648
    %v565 = vsel %vm563, %v564, %v562
    %v566 = vrsqrt.pop %v378
    %v567 = vmul.f32 %v566, %v378
    %v568 = vmul.f32 %v567, %v566
    %v569 = vmul.f32 0.5, %v568
    %v570 = vsub.f32 1.5, %v569
    %v571 = vmul.f32 %v566, %v570
    %v572 = vmul.f32 %v378, %v571
    %vm573 = vcmp.eq.f32.partialorder %v378, inf
    %v574 = vsel %vm573, %v378, %v572
    %vm575 = vcmp.eq.f32.partialorder %v378, 0.0
    %v576 = vand.u32 %v378, 2147483648
    %v577 = vsel %vm575, %v576, %v574
    %v578 = vrsqrt.pop %v379
    %v579 = vmul.f32 %v578, %v379
    %v580 = vmul.f32 %v579, %v578
    %v581 = vmul.f32 0.5, %v580
    %v582 = vsub.f32 1.5, %v581
    %v583 = vmul.f32 %v578, %v582
    %v584 = vmul.f32 %v379, %v583
    %vm585 = vcmp.eq.f32.partialorder %v379, inf
    %v586 = vsel %vm585, %v379, %v584
    %vm587 = vcmp.eq.f32.partialorder %v379, 0.0
    %v588 = vand.u32 %v379, 2147483648
    %v589 = vsel %vm587, %v588, %v586
    %v590 = vrsqrt.pop %v380
    %v591 = vmul.f32 %v590, %v380
    %v592 = vmul.f32 %v591, %v590
    %v593 = vmul.f32 0.5, %v592
    %v594 = vsub.f32 1.5, %v593
    %v595 = vmul.f32 %v590, %v594
    %v596 = vmul.f32 %v380, %v595
    %vm597 = vcmp.eq.f32.partialorder %v380, inf
    %v598 = vsel %vm597, %v380, %v596
    %vm599 = vcmp.eq.f32.partialorder %v380, 0.0
    %v600 = vand.u32 %v380, 2147483648
    %v601 = vsel %vm599, %v600, %v598
    %v602 = vrsqrt.pop %v381
    %v603 = vmul.f32 %v602, %v381
    %v604 = vmul.f32 %v603, %v602
    %v605 = vmul.f32 0.5, %v604
    %v606 = vsub.f32 1.5, %v605
    %v607 = vmul.f32 %v602, %v606
    %v608 = vmul.f32 %v381, %v607
    %vm609 = vcmp.eq.f32.partialorder %v381, inf
    %v610 = vsel %vm609, %v381, %v608
    %vm611 = vcmp.eq.f32.partialorder %v381, 0.0
    %v612 = vand.u32 %v381, 2147483648
    %v613 = vsel %vm611, %v612, %v610
    %v614 = vsub.f32 %v529, 3.0
    %v615 = vsub.f32 %v541, 3.0
    %v616 = vsub.f32 %v553, 3.0
    %v617 = vsub.f32 %v565, 3.0
    %v618 = vsub.f32 %v577, 3.0
    %v619 = vsub.f32 %v589, 3.0
    %v620 = vsub.f32 %v601, 3.0
    %v621 = vsub.f32 %v613, 3.0
    %v622 = vmul.f32 %v614, -0.00020021426
    %v623 = vmul.f32 %v615, -0.00020021426
    %v624 = vmul.f32 %v616, -0.00020021426
    %v625 = vmul.f32 %v617, -0.00020021426
    %v626 = vmul.f32 %v618, -0.00020021426
    %v627 = vmul.f32 %v619, -0.00020021426
    %v628 = vmul.f32 %v620, -0.00020021426
    %v629 = vmul.f32 %v621, -0.00020021426
    %v630 = vadd.f32 %v622, 0.00010095056
    %v631 = vadd.f32 %v623, 0.00010095056
    %v632 = vadd.f32 %v624, 0.00010095056
    %v633 = vadd.f32 %v625, 0.00010095056
    %v634 = vadd.f32 %v626, 0.00010095056
    %v635 = vadd.f32 %v627, 0.00010095056
    %v636 = vadd.f32 %v628, 0.00010095056
    %v637 = vadd.f32 %v629, 0.00010095056
    %v638 = vmul.f32 %v630, %v614
    %v639 = vmul.f32 %v631, %v615
    %v640 = vmul.f32 %v632, %v616
    %v641 = vmul.f32 %v633, %v617
    %v642 = vmul.f32 %v634, %v618
    %v643 = vmul.f32 %v635, %v619
    %v644 = vmul.f32 %v636, %v620
    %v645 = vmul.f32 %v637, %v621
    %v646 = vadd.f32 %v638, 0.0013493432
    %v647 = vadd.f32 %v639, 0.0013493432
    %v648 = vadd.f32 %v640, 0.0013493432
    %v649 = vadd.f32 %v641, 0.0013493432
    %v650 = vadd.f32 %v642, 0.0013493432
    %v651 = vadd.f32 %v643, 0.0013493432
    %v652 = vadd.f32 %v644, 0.0013493432
    %v653 = vadd.f32 %v645, 0.0013493432
    %v654 = vmul.f32 %v646, %v614
    %v655 = vmul.f32 %v647, %v615
    %v656 = vmul.f32 %v648, %v616
    %v657 = vmul.f32 %v649, %v617
    %v658 = vmul.f32 %v650, %v618
    %v659 = vmul.f32 %v651, %v619
    %v660 = vmul.f32 %v652, %v620
    %v661 = vmul.f32 %v653, %v621
    %v662 = vadd.f32 %v654, -0.0036734284
    %v663 = vadd.f32 %v655, -0.0036734284
    %v664 = vadd.f32 %v656, -0.0036734284
    %v665 = vadd.f32 %v657, -0.0036734284
    %v666 = vadd.f32 %v658, -0.0036734284
    %v667 = vadd.f32 %v659, -0.0036734284
    %v668 = vadd.f32 %v660, -0.0036734284
    %v669 = vadd.f32 %v661, -0.0036734284
    %v670 = vmul.f32 %v662, %v614
    %v671 = vmul.f32 %v663, %v615
    %v672 = vmul.f32 %v664, %v616
    %v673 = vmul.f32 %v665, %v617
    %v674 = vmul.f32 %v666, %v618
    %v675 = vmul.f32 %v667, %v619
    %v676 = vmul.f32 %v668, %v620
    %v677 = vmul.f32 %v669, %v621
    %v678 = vadd.f32 %v670, 0.0057395077
    %v679 = vadd.f32 %v671, 0.0057395077
    %v680 = vadd.f32 %v672, 0.0057395077
    %v681 = vadd.f32 %v673, 0.0057395077
    %v682 = vadd.f32 %v674, 0.0057395077
    %v683 = vadd.f32 %v675, 0.0057395077
    %v684 = vadd.f32 %v676, 0.0057395077
    %v685 = vadd.f32 %v677, 0.0057395077
    %v686 = vmul.f32 %v678, %v614
    %v687 = vmul.f32 %v679, %v615
    %v688 = vmul.f32 %v680, %v616
    %v689 = vmul.f32 %v681, %v617
    %v690 = vmul.f32 %v682, %v618
    %v691 = vmul.f32 %v683, %v619
    %v692 = vmul.f32 %v684, %v620
    %v693 = vmul.f32 %v685, %v621
    %v694 = vadd.f32 %v686, -0.0076224613
    %v695 = vadd.f32 %v687, -0.0076224613
    %v696 = vadd.f32 %v688, -0.0076224613
    %v697 = vadd.f32 %v689, -0.0076224613
    %v698 = vadd.f32 %v690, -0.0076224613
    %v699 = vadd.f32 %v691, -0.0076224613
    %v700 = vadd.f32 %v692, -0.0076224613
    %v701 = vadd.f32 %v693, -0.0076224613
    %v702 = vmul.f32 %v694, %v614
    %v703 = vmul.f32 %v695, %v615
    %v704 = vmul.f32 %v696, %v616
    %v705 = vmul.f32 %v697, %v617
    %v706 = vmul.f32 %v698, %v618
    %v707 = vmul.f32 %v699, %v619
    %v708 = vmul.f32 %v700, %v620
    %v709 = vmul.f32 %v701, %v621
    %v710 = vadd.f32 %v702, 0.0094388705
    %v711 = vadd.f32 %v703, 0.0094388705
    %v712 = vadd.f32 %v704, 0.0094388705
    %v713 = vadd.f32 %v705, 0.0094388705
    %v714 = vadd.f32 %v706, 0.0094388705
    %v715 = vadd.f32 %v707, 0.0094388705
    %v716 = vadd.f32 %v708, 0.0094388705
    %v717 = vadd.f32 %v709, 0.0094388705
    %v718 = vmul.f32 %v710, %v614
    %v719 = vmul.f32 %v711, %v615
    %v720 = vmul.f32 %v712, %v616
    %v721 = vmul.f32 %v713, %v617
    %v722 = vmul.f32 %v714, %v618
    %v723 = vmul.f32 %v715, %v619
    %v724 = vmul.f32 %v716, %v620
    %v725 = vmul.f32 %v717, %v621
    %v726 = vadd.f32 %v718, 1.001674
    %v727 = vadd.f32 %v719, 1.001674
    %v728 = vadd.f32 %v720, 1.001674
    %v729 = vadd.f32 %v721, 1.001674
    %v730 = vadd.f32 %v722, 1.001674
    %v731 = vadd.f32 %v723, 1.001674
    %v732 = vadd.f32 %v724, 1.001674
    %v733 = vadd.f32 %v725, 1.001674
    %v734 = vmul.f32 %v726, %v614
    %v735 = vmul.f32 %v727, %v615
    %v736 = vmul.f32 %v728, %v616
    %v737 = vmul.f32 %v729, %v617
    %v738 = vmul.f32 %v730, %v618
    %v739 = vmul.f32 %v731, %v619
    %v740 = vmul.f32 %v732, %v620
    %v741 = vmul.f32 %v733, %v621
    %v742 = vadd.f32 %v734, 2.8329768
    %v743 = vadd.f32 %v735, 2.8329768
    %v744 = vadd.f32 %v736, 2.8329768
    %v745 = vadd.f32 %v737, 2.8329768
    %v746 = vadd.f32 %v738, 2.8329768
    %v747 = vadd.f32 %v739, 2.8329768
    %v748 = vadd.f32 %v740, 2.8329768
    %v749 = vadd.f32 %v741, 2.8329768
    %vm750 = vcmp.lt.f32.partialorder %v374, 5.0
    %vm751 = vcmp.lt.f32.partialorder %v375, 5.0
    %vm752 = vcmp.lt.f32.partialorder %v376, 5.0
    %vm753 = vcmp.lt.f32.partialorder %v377, 5.0
    %vm754 = vcmp.lt.f32.partialorder %v378, 5.0
    %vm755 = vcmp.lt.f32.partialorder %v379, 5.0
    %vm756 = vcmp.lt.f32.partialorder %v380, 5.0
    %vm757 = vcmp.lt.f32.partialorder %v381, 5.0
    %v758 = vsel %vm750, %v510, %v742
    %v759 = vsel %vm751, %v511, %v743
    %v760 = vsel %vm752, %v512, %v744
    %v761 = vsel %vm753, %v513, %v745
    %v762 = vsel %vm754, %v514, %v746
    %v763 = vsel %vm755, %v515, %v747
    %v764 = vsel %vm756, %v516, %v748
    %v765 = vsel %vm757, %v517, %v749
    %v766 = vmul.f32 %v758, %v318
    %v767 = vmul.f32 %v759, %v319
    %v768 = vmul.f32 %v760, %v320
    %v769 = vmul.f32 %v761, %v321
    %v770 = vmul.f32 %v762, %v322
    %v771 = vmul.f32 %v763, %v323
    %v772 = vmul.f32 %v764, %v324
    %v773 = vmul.f32 %v765, %v325
    %v774 = vmul.f32 %v766, 1.4142135
    %v775 = vmul.f32 %v767, 1.4142135
    %v776 = vmul.f32 %v768, 1.4142135
    %v777 = vmul.f32 %v769, 1.4142135
    %v778 = vmul.f32 %v770, 1.4142135
    %v779 = vmul.f32 %v771, 1.4142135
    %v780 = vmul.f32 %v772, 1.4142135
    %v781 = vmul.f32 %v773, 1.4142135
    %v782 = vadd.f32 %v31, 1e-06
    %v783 = vadd.f32 %v33, 1e-06
    %v784 = vrsqrt.pop %v782
    %v785 = vmul.f32 %v784, %v782
    %v786 = vmul.f32 %v785, %v784
    %v787 = vmul.f32 0.5, %v786
    %v788 = vsub.f32 1.5, %v787
    %v789 = vmul.f32 %v784, %v788
    %v790 = vmul.f32 %v782, %v789
    %vm791 = vcmp.eq.f32.partialorder %v782, inf
    %v792 = vsel %vm791, %v782, %v790
    %vm793 = vcmp.eq.f32.partialorder %v782, 0.0
    %v794 = vand.u32 %v782, 2147483648
    %v795 = vsel %vm793, %v794, %v792
    %v796 = vrsqrt.pop %v783
    %v797 = vmul.f32 %v796, %v783
    %v798 = vmul.f32 %v797, %v796
    %v799 = vmul.f32 0.5, %v798
    %v800 = vsub.f32 1.5, %v799
    %v801 = vmul.f32 %v796, %v800
    %v802 = vmul.f32 %v783, %v801
    %vm803 = vcmp.eq.f32.partialorder %v783, inf
    %v804 = vsel %vm803, %v783, %v802
    %vm805 = vcmp.eq.f32.partialorder %v783, 0.0
    %v806 = vand.u32 %v783, 2147483648
    %v807 = vsel %vm805, %v806, %v804
    %v816 = vrot.slane %v775, 7
    %v817 = vrot.slane %v776, 6
    %v818 = vrot.slane %v777, 5
    %v819 = vrot.slane %v778, 4
    %v820 = vrot.slane %v779, 3
    %v821 = vrot.slane %v780, 2
    %v822 = vrot.slane %v781, 1
    %vm823 = vcmask 1040384
    %v824 = vsel %vm823, %v774, %v816
    %vm825 = vcmask 1042434
    %v826 = vsel %vm825, %v817, %v818
    %vm827 = vcmask 1041408
    %v828 = vsel %vm827, %v824, %v826
    %vm829 = vcmask 1044484
    %v830 = vsel %vm829, %v819, %v820
    %vm831 = vcmask 1046534
    %v832 = vsel %vm831, %v821, %v822
    %vm833 = vcmask 1045508
    %v834 = vsel %vm833, %v830, %v832
    %vm835 = vcmask 1043456
    %v836 = vsel %vm835, %v828, %v834
    %vm837 = vcmask 1041409
    %v838 = vsel %vm837, %v774, %v816
    %vm839 = vcmask 1043459
    %v840 = vsel %vm839, %v817, %v818
    %vm841 = vcmask 1042433
    %v842 = vsel %vm841, %v838, %v840
    %vm843 = vcmask 1045509
    %v844 = vsel %vm843, %v819, %v820
    %vm845 = vcmask 1046528
    %v846 = vsel %vm845, %v822, %v821
    %vm847 = vcmask 1046533
    %v848 = vsel %vm847, %v844, %v846
    %vm849 = vcmask 1044481
    %v850 = vsel %vm849, %v842, %v848
    %v851 = vrot.slane %v850, 1
    %v854 = vmul.f32 %v795, %v836
    %v855 = vmul.f32 %v807, %v851
    %v856 = vadd.f32 %v27, %v854
    %v857 = vadd.f32 %v29, %v855
    %860 = vst [vmem:[#allocation1] ss:$2 sm:$0xff] %v856
    %s861 = scalar_lea.vmem [#allocation1], 1
    %862 = vst [vmem:[%s861] ss:$2 sm:$0xff] %v857
    %v863 = vld [vmem:[#allocation1] sm:$0xff]
    %v864 = vld [vmem:[#allocation1 + $0x8] sm:$0xff]
    %867 = vst [vmem:[#allocation7] sm:$0xff] %v863
    %868 = vst [vmem:[#allocation7 + $0x8] sm:$0xff] %v864
    // Predicated region
    $region10: #{_local_reparam_2d.1} parent=1 // pred_check
      _
    $region11: #{_local_reparam_2d.1} parent=1 // pred_check_branch
      %870 = sbr.rel (0) target = $region13
    $region12: #{_local_reparam_2d.1} parent=1 // pred_region
      %872 = vsyncadd [#allocation6], 0
      %s874 = sshll.u32 [#allocation7], 4
      %s875 = int_to_ptr.vmem [resolvable:$true] %s874
      %s876 = sshll.u32 %s2, 4
      %s877 = int_to_ptr.hbm [resolvable:$true] %s876
      %879 = dma.vmem_to_hbm [thread:$0]  %s875, 256, %s877, [#allocation6]
    $region13: #{_local_reparam_2d.1} parent=1 // pred_fallthru
      _
    // Predicated region
    $region14: #{_local_reparam_2d.1} parent=1 // pred_check
      _
    $region15: #{_local_reparam_2d.1} parent=1 // pred_check_branch
      %881 = sbr.rel (0) target = $region17
    $region16: #{_local_reparam_2d.1} parent=1 // pred_region
      %883 = dma.done [#allocation6], 256
    $region17: #{_local_reparam_2d.1} parent=1 // pred_fallthru
      _
    %884 = vsyncpa [#allocation5], 1
    %885 = vsyncpa [#allocation6], 1

</llo_original>
